<compile_context>
chip_gen: v7x
topology: tpu7x:2x2x1
jax: 0.10.0
libtpu: 0.0.40
codegen_flags: <defaults>
</compile_context>

<pallas_src>
import functools
import math

import jax
import jax.numpy as jnp
from jax import lax
from jax.experimental import pallas as pl
from jax.experimental.pallas import tpu as pltpu


# ---------------------------------------------------------------------------
# Chip-aware tiling budgets
# ---------------------------------------------------------------------------

def _round_up(x, m):
    return (x + m - 1) // m * m


def _ceil_div(a, b):
    return -(-a // b)


@functools.lru_cache(maxsize=None)
def _vmem_budget():
    """(vmem_limit_bytes, target_io_block_bytes) chosen per chip generation."""
    phys = 64 * 1024 * 1024                      # conservative default (v7x per-TC VMEM)
    try:
        info = pltpu.get_tpu_info()
        for attr in ("vmem_capacity_bytes", "vmem_bytes", "vmem_size_bytes"):
            v = getattr(info, attr, None)
            if v:
                phys = int(v)
                break
    except Exception:
        pass
    if phys >= 100 * 1024 * 1024:                # v5e / v6e class: 128 MiB physical
        return 96 * 1024 * 1024, 4 * 1024 * 1024
    return min(48 * 1024 * 1024, phys * 3 // 4), 2 * 1024 * 1024


def _choose_dt(d):
    """Channel tile: keep full D unless it is large and 128-aligned."""
    if d > 512 and d % 128 == 0:
        for c in (512, 384, 256, 128):
            if d % c == 0:
                return c
    return d


def _choose_bt(b, d, dt, tb, k_taps, x_itemsize, cdt_itemsize):
    """Batch rows per block: big enough to amortize per-step overhead, VMEM-safe."""
    vmem_limit, target = _vmem_budget()
    per_row_io = tb * dt * x_itemsize
    bt = int(max(1, min(b, target // per_row_io)))

    def vmem_estimate(btv):
        blk_io = btv * tb * dt * x_itemsize      # one I/O block
        blk_c = btv * tb * dt * cdt_itemsize     # one compute-dtype temp
        wm_blk = k_taps * tb * dt * cdt_itemsize
        # 2x double-buffered in + 2x out + wm (2 bufs) + ~3 live temps
        return 4 * blk_io + 2 * wm_blk + 3 * blk_c

    while bt > 1 and vmem_estimate(bt) > vmem_limit * 85 // 100:
        bt = max(1, bt // 2)
    # Megacore: make sure there are >= 2 grid blocks so both TensorCores get work.
    if (d // dt) * _ceil_div(b, bt) < 2 and b >= 2:
        bt = _ceil_div(b, 2)
    return bt, vmem_limit


# ---------------------------------------------------------------------------
# pltpu.roll availability / direction probe (one tiny compile, cached).
# Falls back to a correct (slower) zero-padded shift if roll is unusable.
# ---------------------------------------------------------------------------

_ROLL_PROBE = None


def _probe_roll():
    global _ROLL_PROBE
    if _ROLL_PROBE is None:
        try:
            def k(x_ref, o_ref):
                o_ref[...] = pltpu.roll(x_ref[...], 5, 1)

            x = lax.broadcasted_iota(jnp.float32, (1, 24, 128), 1)
            out = pl.pallas_call(
                k, out_shape=jax.ShapeDtypeStruct((1, 24, 128), jnp.float32))(x)
            v = float(out[0, 6, 0])
            if abs(v - 1.0) < 0.5:      # jnp.roll convention: out[t] = x[t - shift]
                _ROLL_PROBE = (True, 1)
            elif abs(v - 11.0) < 0.5:   # opposite convention: out[t] = x[t + shift]
                _ROLL_PROBE = (True, -1)
            else:
                _ROLL_PROBE = (False, 1)
        except Exception:
            _ROLL_PROBE = (False, 1)
    return _ROLL_PROBE


# ---------------------------------------------------------------------------
# Shared residual depthwise-conv kernel
# ---------------------------------------------------------------------------

def _dwconv_residual(x, wm, offsets):
    """out[b,t,c] = x[b,t,c] + sum_k wm[k,t,c] * x[b, t + offsets[k], c].

    wm folds the conv tap weight, all boundary/CLS masks and the adapter scale;
    any (k, t) whose neighbour t + offsets[k] is invalid has wm == 0.  wm's token
    axis length tb is a multiple of 8 with tb >= x token count (padded block).
    """
    b, n, d = x.shape
    k_taps, tb, wd = wm.shape
    assert wd == d and k_taps == len(offsets)
    assert tb >= n and tb % 8 == 0
    cdt = wm.dtype                                  # compute dtype (f32, or bf16 for bf16 I/O)
    dt = _choose_dt(d)
    bt, vmem_limit = _choose_bt(b, d, dt, tb, k_taps,
                                jnp.dtype(x.dtype).itemsize, jnp.dtype(cdt).itemsize)
    # Batch is the innermost grid axis so the wm block index is unchanged across it
    # and Pallas does not re-DMA the weights every step.
    grid = (d // dt, pl.cdiv(b, bt))
    roll_ok, roll_sign = _probe_roll()

    def shift_tokens(xz, off):
        # s[:, t, :] == xz[:, t + off, :] wherever wm is nonzero (wrap is masked).
        if off == 0:
            return xz
        if roll_ok:
            return pltpu.roll(xz, (-off * roll_sign) % tb, 1)   # XLU slot, no VMEM copy
        # Fallback: zero-padded shift via concatenate (correct, slower).
        z = jnp.zeros((xz.shape[0], abs(off), xz.shape[2]), xz.dtype)
        if off > 0:
            return jnp.concatenate([xz[:, off:, :], z], axis=1)
        return jnp.concatenate([z, xz[:, :off, :]], axis=1)

    def kernel(x_ref, wm_ref, o_ref):
        xv = x_ref[...]
        if tb > n:
            # Zero the padded token rows of the partial block once, so that
            # 0 * (possible NaN garbage) never reaches valid rows.
            tok = lax.broadcasted_iota(jnp.int32, (1, tb, 1), 1)
            xv = jnp.where(tok < n, xv, 0)
        xz = xv.astype(cdt)
        y = xz * wm_ref[offsets.index(0)]
        for k, off in enumerate(offsets):
            if off == 0:
                continue
            y = y + shift_tokens(xz, off) * wm_ref[k]
        o_ref[...] = (xz + y).astype(o_ref.dtype)

    return pl.pallas_call(
        kernel,
        out_shape=jax.ShapeDtypeStruct((b, n, d), x.dtype),
        grid=grid,
        in_specs=[
            pl.BlockSpec((bt, tb, dt), lambda di, bi: (bi, 0, di)),
            pl.BlockSpec((k_taps, tb, dt), lambda di, bi: (0, 0, di)),
        ],
        out_specs=pl.BlockSpec((bt, tb, dt), lambda di, bi: (bi, 0, di)),
        compiler_params=pltpu.CompilerParams(
            dimension_semantics=("parallel", "parallel"),
            vmem_limit_bytes=vmem_limit),
    )(x, wm)


# ---------------------------------------------------------------------------
# Masked-weight builders (wrapper side; hoisted out of the kernel entirely)
# ---------------------------------------------------------------------------

def _compute_dtype(x_dtype):
    return jnp.bfloat16 if x_dtype == jnp.bfloat16 else jnp.float32


def _text_masked_weights(w, n, tb, scale, cdt):
    """(3, tb, D) per-position masked taps for a k=3 depthwise Conv1d, zero padding."""
    offsets = (-1, 0, 1)
    t = jnp.arange(tb)
    valid = t < n
    taps = []
    for k, off in enumerate(offsets):
        src = t + off
        m = (valid & (src >= 0) & (src < n)).astype(jnp.float32)
        taps.append(m[:, None] * w[:, k].astype(jnp.float32)[None, :])
    wm = jnp.stack(taps, axis=0) * jnp.asarray(scale, jnp.float32)
    return wm.astype(cdt), offsets


def _visual_masked_weights(w, p, tb, scale, cdt):
    """(9, tb, D) masked taps for a 3x3 depthwise Conv2d on the p x p patch grid,
    flattened onto the token axis (token 0 = CLS -> all taps masked -> passthrough)."""
    n = 1 + p * p
    t = jnp.arange(tb)
    q = t - 1
    row, col = q // p, q % p
    is_patch = (t >= 1) & (t < n)
    taps, offsets = [], []
    for ki in range(3):
        for kj in range(3):
            di, dj = ki - 1, kj - 1
            offsets.append(di * p + dj)
            m = (is_patch
                 & (row + di >= 0) & (row + di < p)
                 & (col + dj >= 0) & (col + dj < p)).astype(jnp.float32)
            taps.append(m[:, None] * w[:, ki, kj].astype(jnp.float32)[None, :])
    wm = jnp.stack(taps, axis=0) * jnp.asarray(scale, jnp.float32)
    return wm.astype(cdt), tuple(offsets)


# ---------------------------------------------------------------------------
# Public adapter ops
# ---------------------------------------------------------------------------

def dwconv1d_adapted(x, w, scale):
    """Text adapter: x + scale * depthwise_conv1d_k3(x).  x: (B, N, D), w: (D, 3)."""
    b, n, d = x.shape
    assert w.shape == (d, 3)
    cdt = _compute_dtype(x.dtype)
    tb = _round_up(n, 8)
    wm, offsets = _text_masked_weights(w, n, tb, scale, cdt)
    return _dwconv_residual(x, wm, offsets)


def dwconv2d_adapted_visual(x, w, scale):
    """Visual adapter: CLS row untouched; patch tokens get a 3x3 depthwise Conv2d
    residual with scale.  x: (B, 1 + p*p, D), w: (D, 3, 3)."""
    b, n_tok, d = x.shape
    p = int(math.isqrt(n_tok - 1))
    assert p * p == n_tok - 1, "visual token count must be 1 + p*p"
    assert w.shape == (d, 3, 3)
    cdt = _compute_dtype(x.dtype)
    tb = _round_up(n_tok, 8)
    wm, offsets = _visual_masked_weights(w, p, tb, scale, cdt)
    return _dwconv_residual(x, wm, offsets)


# ---------------------------------------------------------------------------
# AdapterLearner-equivalent (compute parts only)
# ---------------------------------------------------------------------------

class AdapterLearnerPallas:
    """JAX/Pallas port of the compute path of AdapterLearner.

    Activations are channel-last (B, tokens, D) so the adapter needs no layout copies;
    callers porting from the PyTorch (n_token, B, D) convention should keep the
    surrounding model channel-last (or transpose once at the model boundary).
    """

    def __init__(self, key, d_model, n_layers, l_start, l_end,
                 adapter_scale=0.5, adapter_scale_factor=2.0, slow_fast_ratio=0.5,
                 dtype=jnp.float32):
        self.d_model = d_model
        self.channel = d_model * 4
        self.adapter_scale = float(adapter_scale)
        self.adapter_scale_factor = float(adapter_scale_factor)
        self.slow_fast_ratio = slow_fast_ratio
        self.text_adapter = [None] * (n_layers + 1)
        self.visual_adapter = [None] * (n_layers + 1)
        for i in range(l_start, l_end + 1):
            key, k1, k2, k3, k4 = jax.random.split(key, 5)
            bound_d = 1.0 / math.sqrt(3.0)        # kaiming-uniform-ish, deterministic
            bound_c = 1.0 / math.sqrt(9.0)
            self.text_adapter[i] = {
                # Conv1d(D, D, 3, groups=D)  -> weight (D, 1, 3), stored as (D, 3)
                "att_conv": jax.random.uniform(k1, (d_model, 3), dtype, -bound_d, bound_d),
                "mlp_conv": jax.random.uniform(k2, (self.channel, 3), dtype, -bound_d, bound_d),
            }
            self.visual_adapter[i] = {
                # Conv2d(D, D, 3, groups=D)  -> weight (D, 1, 3, 3), stored as (D, 3, 3)
                "att_conv": jax.random.uniform(k3, (d_model, 3, 3), dtype, -bound_c, bound_c),
                "mlp_conv": jax.random.uniform(k4, (self.channel, 3, 3), dtype, -bound_c, bound_c),
            }

    # TODO(synk): training-time stochastic slow/fast scale selection
    # (torch.rand(1) > slow_fast_ratio) is a host-side random branch; eval-mode scale
    # is used here.  Scale is folded into the masked weights (linearity of the conv),
    # so either scale value reuses the same compiled kernel.
    def return_text_adapter(self, index):
        return self.text_adapter[index], self.adapter_scale, self.return_text_adapted_x

    def return_visual_adapter(self, index):
        return self.visual_adapter[index], self.adapter_scale, self.return_visual_adapted_x

    def return_text_adapted_x(self, x, conv_w, scale):
        # x: (B, n_token, C) channel-last ; conv_w: (C, 3)
        return dwconv1d_adapted(x, conv_w, scale)

    def return_visual_adapted_x(self, x, conv_w, scale):
        # x: (B, 1 + p*p, C) channel-last ; conv_w: (C, 3, 3)
        return dwconv2d_adapted_visual(x, conv_w, scale)

    def update_adapter_scale(self, scale_factor):
        self.adapter_scale = self.adapter_scale * float(scale_factor)

    def forward(self):
        return self.return_text_adapter, self.return_visual_adapter


# ---------------------------------------------------------------------------
# Pure-JAX references (lax depthwise conv), channel-last, for correctness check
# ---------------------------------------------------------------------------

def _ref_text_cl(x, w, scale):
    b, n, d = x.shape
    lhs = jnp.transpose(x, (0, 2, 1))                    # (B, D, N)
    rhs = w[:, None, :]                                  # (D, 1, 3)
    y = jax.lax.conv_general_dilated(
        lhs, rhs, (1,), [(1, 1)],
        dimension_numbers=("NCH", "OIH", "NCH"),
        feature_group_count=d)
    y = jnp.transpose(y, (0, 2, 1))                      # (B, N, D)
    return x + scale * y


def _ref_visual_cl(x, w, scale):
    b, n_tok, d = x.shape
    p = int(math.isqrt(n_tok - 1))
    cls_tok, patches = x[:, :1, :], x[:, 1:, :]
    lhs = jnp.transpose(patches, (0, 2, 1)).reshape(b, d, p, p)
    rhs = w[:, None, :, :]                               # (D, 1, 3, 3)
    y = jax.lax.conv_general_dilated(
        lhs, rhs, (1, 1), [(1, 1), (1, 1)],
        dimension_numbers=("NCHW", "OIHW", "NCHW"),
        feature_group_count=d)
    y = jnp.transpose(y.reshape(b, d, p * p), (0, 2, 1))
    return jnp.concatenate([cls_tok, patches + scale * y], axis=1)


# ---------------------------------------------------------------------------

if __name__ == "__main__":
    key = jax.random.PRNGKey(0)
    kp, kx1, kx2, kx3, kx4, kx5 = jax.random.split(key, 6)

    d_model = 128                # lane-dense output (>= 128), per the perf review
    channel = d_model * 4        # 512
    batch = 4
    n_text_tokens = 16           # text sequence length
    p_size = 4                   # visual patch grid -> 1 + 16 = 17 tokens (padded to 24 in-block)
    n_vis_tokens = 1 + p_size * p_size
    n_layers, l_start, l_end = 4, 1, 3

    learner = AdapterLearnerPallas(kp, d_model, n_layers, l_start, l_end,
                                   adapter_scale=0.5, adapter_scale_factor=2.0,
                                   slow_fast_ratio=0.5)
    text_parser, visual_parser = learner.forward()

    # Channel-last activations (B, tokens, D): no permutes needed around the adapter.
    x_text_att = jax.random.normal(kx1, (batch, n_text_tokens, d_model), jnp.float32)
    x_text_mlp = jax.random.normal(kx2, (batch, n_text_tokens, channel), jnp.float32)
    x_vis_att = jax.random.normal(kx3, (batch, n_vis_tokens, d_model), jnp.float32)
    x_vis_mlp = jax.random.normal(kx4, (batch, n_vis_tokens, channel), jnp.float32)
    x_vis_bf16 = jax.random.normal(kx5, (batch, n_vis_tokens, channel),
                                   jnp.float32).astype(jnp.bfloat16)

    layer_idx = 2
    t_adapter, t_scale, t_func = text_parser(layer_idx)
    v_adapter, v_scale, v_func = visual_parser(layer_idx)

    out_t_att = t_func(x_text_att, t_adapter["att_conv"], t_scale)
    out_t_mlp = t_func(x_text_mlp, t_adapter["mlp_conv"], t_scale)
    out_v_att = v_func(x_vis_att, v_adapter["att_conv"], v_scale)
    out_v_mlp = v_func(x_vis_mlp, v_adapter["mlp_conv"], v_scale)
    out_v_bf16 = v_func(x_vis_bf16, v_adapter["mlp_conv"], v_scale)  # bf16 I/O + bf16 MAC path

    jax.block_until_ready((out_t_att, out_t_mlp, out_v_att, out_v_mlp, out_v_bf16))

    # Verify against lax depthwise-conv references.
    ref_t_att = _ref_text_cl(x_text_att, t_adapter["att_conv"], t_scale)
    ref_t_mlp = _ref_text_cl(x_text_mlp, t_adapter["mlp_conv"], t_scale)
    ref_v_att = _ref_visual_cl(x_vis_att, v_adapter["att_conv"], v_scale)
    ref_v_mlp = _ref_visual_cl(x_vis_mlp, v_adapter["mlp_conv"], v_scale)
    ref_v_bf16 = _ref_visual_cl(x_vis_bf16.astype(jnp.float32),
                                v_adapter["mlp_conv"], v_scale)

    assert jnp.allclose(out_t_att, ref_t_att, atol=1e-5, rtol=1e-5)
    assert jnp.allclose(out_t_mlp, ref_t_mlp, atol=1e-5, rtol=1e-5)
    assert jnp.allclose(out_v_att, ref_v_att, atol=1e-5, rtol=1e-5)
    assert jnp.allclose(out_v_mlp, ref_v_mlp, atol=1e-5, rtol=1e-5)
    assert jnp.allclose(out_v_bf16.astype(jnp.float32), ref_v_bf16, atol=1e-1, rtol=5e-2)

    print("KERNEL_OK")
</pallas_src>

<mosaic_0001>
module attributes {stable_mosaic.version = 11 : i64} {
  func.func @k(%arg0: memref<1x24x128xf32, #tpu.memory_space<vmem>>, %arg1: memref<1x24x128xf32, #tpu.memory_space<vmem>>) attributes {dimension_semantics = [], scalar_prefetch = 0 : i64, scratch_operands = 0 : i64, tpu.core_type = #tpu.core_type<tc>} {
    %c0 = arith.constant 0 : index
    %c0_0 = arith.constant 0 : index
    %c0_1 = arith.constant 0 : index
    %0 = vector.load %arg0[%c0, %c0_0, %c0_1] : memref<1x24x128xf32, #tpu.memory_space<vmem>>, vector<1x24x128xf32>
    %c5_i32 = arith.constant 5 : i32
    %1 = tpu.dynamic_rotate %0 by %c5_i32 dim 1 : vector<1x24x128xf32>, i32 -> vector<1x24x128xf32>
    %c0_2 = arith.constant 0 : index
    %c0_3 = arith.constant 0 : index
    %c0_4 = arith.constant 0 : index
    %2 = vector.load %arg1[%c0_2, %c0_3, %c0_4] : memref<1x24x128xf32, #tpu.memory_space<vmem>>, vector<1x24x128xf32>
    tpu.vector_store %arg1[%c0_2, %c0_3, %c0_4], %1 {strides = array<i32>} : memref<1x24x128xf32, #tpu.memory_space<vmem>>, vector<1x24x128xf32>,
    return
  }
}

module attributes {stable_mosaic.version = 11 : i64} {
  func.func @kernel(%arg0: i32, %arg1: i32, %arg2: memref<2x16x128xf32, #tpu.memory_space<vmem>>, %arg3: memref<3x16x128xf32, #tpu.memory_space<vmem>>, %arg4: memref<2x16x128xf32, #tpu.memory_space<vmem>>) attributes {dimension_semantics = [#tpu.dimension_semantics<parallel>, #tpu.dimension_semantics<parallel>], iteration_bounds = array<i64: 1, 2>, scalar_prefetch = 0 : i64, scratch_operands = 0 : i64, tpu.core_type = #tpu.core_type<tc>, window_params = [{transform_indices = @transform_0, window_bounds = array<i64: 2, 16, 128>}, {transform_indices = @transform_1, window_bounds = array<i64: 3, 16, 128>}, {transform_indices = @transform_2, window_bounds = array<i64: 2, 16, 128>}]} {
    %c0 = arith.constant 0 : index
    %c0_0 = arith.constant 0 : index
    %c0_1 = arith.constant 0 : index
    %0 = vector.load %arg2[%c0, %c0_0, %c0_1] : memref<2x16x128xf32, #tpu.memory_space<vmem>>, vector<2x16x128xf32>
    %c1 = arith.constant 1 : index
    %c0_2 = arith.constant 0 : index
    %c0_3 = arith.constant 0 : index
    %1 = vector.load %arg3[%c1, %c0_2, %c0_3] : memref<3x16x128xf32, #tpu.memory_space<vmem>>, vector<1x16x128xf32>
    %2 = vector.shape_cast %1 : vector<1x16x128xf32> to vector<16x128xf32>
    %3 = vector.shape_cast %2 : vector<16x128xf32> to vector<1x16x128xf32>
    %4 = vector.broadcast %3 : vector<1x16x128xf32> to vector<2x16x128xf32>
    %5 = arith.mulf %0, %4 : vector<2x16x128xf32>
    %cst = arith.constant 0.000000e+00 : f32
    %6 = vector.broadcast %cst : f32 to vector<2x1x128xf32>
    %7 = vector.extract_strided_slice %0 {offsets = [0, 0, 0], sizes = [2, 15, 128], strides = [1, 1, 1]} : vector<2x16x128xf32> to vector<2x15x128xf32>
    %8 = tpu.concatenate %6, %7 in 1 : vector<2x1x128xf32>, vector<2x15x128xf32> -> vector<2x16x128xf32>
    %c0_4 = arith.constant 0 : index
    %c0_5 = arith.constant 0 : index
    %c0_6 = arith.constant 0 : index
    %9 = vector.load %arg3[%c0_4, %c0_5, %c0_6] : memref<3x16x128xf32, #tpu.memory_space<vmem>>, vector<1x16x128xf32>
    %10 = vector.shape_cast %9 : vector<1x16x128xf32> to vector<16x128xf32>
    %11 = vector.shape_cast %10 : vector<16x128xf32> to vector<1x16x128xf32>
    %12 = vector.broadcast %11 : vector<1x16x128xf32> to vector<2x16x128xf32>
    %13 = arith.mulf %8, %12 : vector<2x16x128xf32>
    %14 = arith.addf %5, %13 : vector<2x16x128xf32>
    %cst_7 = arith.constant 0.000000e+00 : f32
    %15 = vector.broadcast %cst_7 : f32 to vector<2x1x128xf32>
    %16 = vector.extract_strided_slice %0 {offsets = [0, 1, 0], sizes = [2, 15, 128], strides = [1, 1, 1]} : vector<2x16x128xf32> to vector<2x15x128xf32>
    %17 = tpu.concatenate %16, %15 in 1 : vector<2x15x128xf32>, vector<2x1x128xf32> -> vector<2x16x128xf32>
    %c2 = arith.constant 2 : index
    %c0_8 = arith.constant 0 : index
    %c0_9 = arith.constant 0 : index
    %18 = vector.load %arg3[%c2, %c0_8, %c0_9] : memref<3x16x128xf32, #tpu.memory_space<vmem>>, vector<1x16x128xf32>
    %19 = vector.shape_cast %18 : vector<1x16x128xf32> to vector<16x128xf32>
    %20 = vector.shape_cast %19 : vector<16x128xf32> to vector<1x16x128xf32>
    %21 = vector.broadcast %20 : vector<1x16x128xf32> to vector<2x16x128xf32>
    %22 = arith.mulf %17, %21 : vector<2x16x128xf32>
    %23 = arith.addf %14, %22 : vector<2x16x128xf32>
    %24 = arith.addf %0, %23 : vector<2x16x128xf32>
    %c0_10 = arith.constant 0 : index
    %c0_11 = arith.constant 0 : index
    %c0_12 = arith.constant 0 : index
    %25 = vector.load %arg4[%c0_10, %c0_11, %c0_12] : memref<2x16x128xf32, #tpu.memory_space<vmem>>, vector<2x16x128xf32>
    tpu.vector_store %arg4[%c0_10, %c0_11, %c0_12], %24 {strides = array<i32>} : memref<2x16x128xf32, #tpu.memory_space<vmem>>, vector<2x16x128xf32>,
    return
  }
  func.func @transform_0(%arg0: i32, %arg1: i32) -> (i32, i32, i32) {
    %c0_i32 = arith.constant 0 : i32
    %c0_i32_0 = arith.constant 0 : i32
    return %arg1, %c0_i32, %arg0 : i32, i32, i32
  }
  func.func @transform_1(%arg0: i32, %arg1: i32) -> (i32, i32, i32) {
    %c0_i32 = arith.constant 0 : i32
    %c0_i32_0 = arith.constant 0 : i32
    %c0_i32_1 = arith.constant 0 : i32
    return %c0_i32, %c0_i32_0, %arg0 : i32, i32, i32
  }
  func.func @transform_2(%arg0: i32, %arg1: i32) -> (i32, i32, i32) {
    %c0_i32 = arith.constant 0 : i32
    %c0_i32_0 = arith.constant 0 : i32
    return %arg1, %c0_i32, %arg0 : i32, i32, i32
  }
}

</mosaic_0001>

<llo_original>
// kernel: tpu_custom_call.1
$region0: #{tpu_custom_call.1}
  #allocation0 [shape = 'u32[]', space=smem, size = 0x4, offset = 0x4, fixed_abs, tag = 'smem constant byte address 0x4 - core index']
  #allocation1 [shape = 'u32[144,128]{1,0:T(1,128)}', space=vmem, size = 0x12000, scoped, tag = 'internal scratch']
  %s0 = inlined_call_operand.hbm [shape: f32[1,24,128], index: 0, kind: input, shape index: {}]
  %s1 = inlined_call_operand.hbm [shape: f32[1,24,128], index: 1, kind: output, shape index: {}]
  %s2 = sld [smem:[#allocation0]]
  $region18: #{tpu_custom_call.1} parent=0
    _
  %s4 = ssub.s32 1, %s2
  %s5 = scalar_select 0, %s4, %s2
  $region1: #{tpu_custom_call.1} parent=0
    #allocation2 [shape = 'u8[12288]{0}', space=vmem, size = 0x3000, scoped, tag = 'input window, operand 0, single buffered']
    #allocation3 [shape = 's32[1]{0}', space=sflag, size = 0x4, scoped, tag = 'scoped memory for tpu_custom_call.1']
    #allocation4 [shape = 's32[1]{0}', space=sflag, size = 0x4, scoped, tag = 'scoped memory for tpu_custom_call.1']
    #allocation5 [shape = 'u8[12288]{0}', space=vmem, size = 0x3000, scoped, tag = 'output window, operand 0, single buffered']
    %6 = vsyncpa [#allocation3], 0
    %7 = vsyncpa [#allocation4], 0
    // Predicated region
    $region2: #{tpu_custom_call.1} parent=1 // pred_check
      _
    $region3: #{tpu_custom_call.1} parent=1 // pred_check_branch
      %9 = sbr.rel (0) target = $region5
    $region4: #{tpu_custom_call.1} parent=1 // pred_region
      %s11 = ssub.s32 384, 384
      %12 = vsyncadd [#allocation3], %s11
      %s13 = sshll.u32 [#allocation2], 4
      %s14 = int_to_ptr.vmem [resolvable:$true] %s13
      %19 = dma.hbm_to_vmem [thread:$0]  %s0, 384, %s14, [#allocation3], 128, 128, 8
    $region5: #{tpu_custom_call.1} parent=1 // pred_fallthru
      _
    // Predicated region
    $region6: #{tpu_custom_call.1} parent=1 // pred_check
      _
    $region7: #{tpu_custom_call.1} parent=1 // pred_check_branch
      %21 = sbr.rel (0) target = $region9
    $region8: #{tpu_custom_call.1} parent=1 // pred_region
      %22 = dma.done [#allocation3], 384
    $region9: #{tpu_custom_call.1} parent=1 // pred_fallthru
      _
    %v23 = vld [vmem:[#allocation2] sm:$0xff]
    %v24 = vld [vmem:[#allocation2 + $0x8] sm:$0xff]
    %v25 = vld [vmem:[#allocation2 + $0x10] sm:$0xff]
    %v26 = vrot.slane %v23, 3
    %v27 = vrot.slane %v24, 3
    %v28 = vrot.slane %v25, 3
    %v29 = vlaneseq
    %v30 = vshrl.u32 %v29, 7
    %vm31 = vcmp.lt.s32.totalorder %v30, 5
    %v32 = vsel %vm31, %v27, %v28
    %v33 = vsel %vm31, %v26, %v27
    %v34 = vsel %vm31, %v28, %v26
    %35 = vst [vmem:[#allocation5] sm:$0xff] %v34
    %36 = vst [vmem:[#allocation5 + $0x8] sm:$0xff] %v33
    %37 = vst [vmem:[#allocation5 + $0x10] sm:$0xff] %v32
    // Predicated region
    $region10: #{tpu_custom_call.1} parent=1 // pred_check
      _
    $region11: #{tpu_custom_call.1} parent=1 // pred_check_branch
      %39 = sbr.rel (0) target = $region13
    $region12: #{tpu_custom_call.1} parent=1 // pred_region
      %s41 = ssub.s32 384, 384
      %42 = vsyncadd [#allocation4], %s41
      %s43 = sshll.u32 [#allocation5], 4
      %s44 = int_to_ptr.vmem [resolvable:$true] %s43
      %49 = dma.vmem_to_hbm [thread:$0]  %s44, 384, %s1, [#allocation4], 128, 128, 8
    $region13: #{tpu_custom_call.1} parent=1 // pred_fallthru
      _
    // Predicated region
    $region14: #{tpu_custom_call.1} parent=1 // pred_check
      _
    $region15: #{tpu_custom_call.1} parent=1 // pred_check_branch
      %51 = sbr.rel (0) target = $region17
    $region16: #{tpu_custom_call.1} parent=1 // pred_region
      %52 = dma.done [#allocation4], 384
    $region17: #{tpu_custom_call.1} parent=1 // pred_fallthru
      _
    %53 = vsyncpa [#allocation3], 1
    %54 = vsyncpa [#allocation4], 1

// kernel: tpu_custom_call.1
$region0: #{tpu_custom_call.1}
  #allocation0 [shape = 'u32[]', space=smem, size = 0x4, offset = 0x4, fixed_abs, tag = 'smem constant byte address 0x4 - core index']
  #allocation1 [shape = 'u32[144,128]{1,0:T(1,128)}', space=vmem, size = 0x12000, scoped, tag = 'internal scratch']
  %s0 = inlined_call_operand.hbm [shape: f32[4,16,128], index: 0, kind: input, shape index: {}]
  %s1 = inlined_call_operand.hbm [shape: f32[3,16,128], index: 1, kind: input, shape index: {}]
  %s2 = inlined_call_operand.hbm [shape: f32[4,16,128], index: 2, kind: output, shape index: {}]
  %s3 = sld [smem:[#allocation0]]
  $region49: #{tpu_custom_call.1} parent=0
    _
  %s5 = ssub.s32 1, %s3
  %s6 = scalar_select 0, %s5, %s3
  $region1: #{tpu_custom_call.1} parent=0
    #allocation2 [shape = 'u8[32768]{0}', space=vmem, size = 0x8000, scoped, tag = 'input window, operand 0']
    #allocation3 [shape = 's32[2]{0}', space=sflag, size = 0x8, scoped, tag = 'scoped memory for tpu_custom_call.1']
    #allocation4 [shape = 's32[2]{0}', space=sflag, size = 0x8, scoped, tag = 'scoped memory for tpu_custom_call.1']
    #allocation5 [shape = 'u8[24576]{0}', space=vmem, size = 0x6000, scoped, tag = 'input window, operand 1, single buffered']
    #allocation6 [shape = 's32[1]{0}', space=sflag, size = 0x4, scoped, tag = 'scoped memory for tpu_custom_call.1']
    #allocation7 [shape = 'u8[32768]{0}', space=vmem, size = 0x8000, scoped, tag = 'output window, operand 0']
    %7 = vsyncpa [#allocation3], 0
    %s8 = scalar_lea.sflag [#allocation3], 1
    %9 = vsyncpa %s8, 0
    %10 = vsyncpa [#allocation6], 0
    %11 = vsyncpa [#allocation4], 0
    %s12 = scalar_lea.sflag [#allocation4], 1
    %13 = vsyncpa %s12, 0
    loop: start=0, step=1, limit=4
    $region2: #{tpu_custom_call.1} parent=1 // loop_pre_header
      _
    $region3: #{tpu_custom_call.1} parent=1 // loop_header
      %s15 = sphi 0, %s19
      %p16 = scmp.ge.s32.totalorder %s15, 4
      %s22 = sphi 0, %s34
      %s23 = sphi 0, %s30
      %s24 = sphi 0, %s22
      %s25 = sphi 0, %s23
      %s26 = sphi 0, %s24
      %s27 = sphi 0, %s25
      %s39 = sphi 0, %s41
      %s42 = sphi 0, %s39
      %s43 = sphi 0, %s42
      %s59 = sphi 0, %s43
      %s65 = sphi 0, %s67
      %s68 = sphi 0, %s65
      %s69 = sphi 0, %s68
      %s85 = sphi 0, %s69
      %s93 = sphi 0, %s95
      %s96 = sphi 0, %s93
      %s97 = sphi 0, %s96
      %s113 = sphi 0, %s97
    $region4: #{tpu_custom_call.1} parent=1 // loop_header_branch
      %18 = sbr.rel (%p16) target = $region8
    $region5: #{tpu_custom_call.1} parent=1 // loop_body
      %s20 = ssub.s32 %s15, 1
      %s21 = ssub.s32 %s15, 2
      %s28 = sadd.s32 1, %s23
      %p29 = scmp.ge.s32.totalorder %s28, 2
      %s30 = scalar_select %p29, 0, %s28
      %s31 = sadd.s32 1, %s22
      %s32 = scalar_select %p29, %s31, %s22
      %p33 = scmp.ge.s32.totalorder %s32, 1
      %s34 = scalar_select %p33, 0, %s32
      %s35 = ssub.s32 %s23, %s30
      %s36 = ssub.s32 %s22, %s34
      %s37 = sor.u32 %s35, %s36
      %p38 = scmp.eq.s32.totalorder %s37, 0
      %s40 = sadd.s32 %s39, 1
      %s41 = scalar_select %p38, %s39, %s40
      %p44 = pneg %p38
      %p45 = scmp.eq.s32.totalorder %s15, 1
      %p46 = por %p44, %p45
      %p47 = scmp.ne.s32.totalorder %s39, %s42
      %p48 = scmp.eq.s32.totalorder %s15, 0
      %p49 = por %p47, %p48
      %p50 = scmp.ne.s32.totalorder %s39, %s42
      %p51 = scmp.eq.s32.totalorder %s20, 1
      %p52 = por %p50, %p51
      %p53 = scmp.ne.s32.totalorder %s42, %s43
      %p54 = scmp.eq.s32.totalorder %s20, 0
      %p55 = por %p53, %p54
      %p56 = scmp.ne.s32.totalorder %s42, %s43
      %p57 = scmp.eq.s32.totalorder %s21, 1
      %p58 = por %p56, %p57
      %p60 = scmp.ne.s32.totalorder %s43, %s59
      %p61 = scmp.eq.s32.totalorder %s21, 0
      %p62 = por %p60, %p61
      %s63 = ssub.s32 %s22, %s34
      %p64 = scmp.eq.s32.totalorder %s63, 0
      %s66 = sadd.s32 %s65, 1
      %s67 = scalar_select %p64, %s65, %s66
      %p70 = pneg %p64
      %p71 = scmp.eq.s32.totalorder %s15, 1
      %p72 = por %p70, %p71
      %p73 = scmp.ne.s32.totalorder %s65, %s68
      %p74 = scmp.eq.s32.totalorder %s15, 0
      %p75 = por %p73, %p74
      %p76 = scmp.ne.s32.totalorder %s65, %s68
      %p77 = scmp.eq.s32.totalorder %s20, 1
      %p78 = por %p76, %p77
      %p79 = scmp.ne.s32.totalorder %s68, %s69
      %p80 = scmp.eq.s32.totalorder %s20, 0
      %p81 = por %p79, %p80
      %p82 = scmp.ne.s32.totalorder %s68, %s69
      %p83 = scmp.eq.s32.totalorder %s21, 1
      %p84 = por %p82, %p83
      %p86 = scmp.ne.s32.totalorder %s69, %s85
      %p87 = scmp.eq.s32.totalorder %s21, 0
      %p88 = por %p86, %p87
      %s89 = ssub.s32 %s23, %s30
      %s90 = ssub.s32 %s22, %s34
      %s91 = sor.u32 %s89, %s90
      %p92 = scmp.eq.s32.totalorder %s91, 0
      %s94 = sadd.s32 %s93, 1
      %s95 = scalar_select %p92, %s93, %s94
      %p98 = pneg %p92
      %p99 = scmp.eq.s32.totalorder %s15, 1
      %p100 = por %p98, %p99
      %p101 = scmp.ne.s32.totalorder %s93, %s96
      %p102 = scmp.eq.s32.totalorder %s15, 0
      %p103 = por %p101, %p102
      %p104 = scmp.ne.s32.totalorder %s93, %s96
      %p105 = scmp.eq.s32.totalorder %s20, 1
      %p106 = por %p104, %p105
      %p107 = scmp.ne.s32.totalorder %s96, %s97
      %p108 = scmp.eq.s32.totalorder %s20, 0
      %p109 = por %p107, %p108
      %p110 = scmp.ne.s32.totalorder %s96, %s97
      %p111 = scmp.eq.s32.totalorder %s21, 1
      %p112 = por %p110, %p111
      %p114 = scmp.ne.s32.totalorder %s97, %s113
      %p115 = scmp.eq.s32.totalorder %s21, 0
      %p116 = por %p114, %p115
      %p117 = scmp.le.s32.totalorder 1, %s15
      %p118 = scmp.lt.s32.totalorder %s15, 3
      %p119 = pnand %p117, %p118
      %p120 = pneg %p119
      // Predicated region
      $region9: #{tpu_custom_call.1} parent=5 // pred_check
        _
      $region10: #{tpu_custom_call.1} parent=5 // pred_check_branch
        %122 = sbr.rel (%p119) target = $region12
      $region11: #{tpu_custom_call.1} parent=5 // pred_region
        %s123 = ssub.s32 %s15, 1
        // Predicated region
        $region13: #{tpu_custom_call.1} parent=11 // pred_check
          %p124 = pneg %p81
        $region14: #{tpu_custom_call.1} parent=11 // pred_check_branch
          %126 = sbr.rel (%p124) target = $region16
        $region15: #{tpu_custom_call.1} parent=11 // pred_region
          %s128 = ssub.s32 768, 768
          %129 = vsyncadd [#allocation6], %s128
          %s130 = smul.addr %s24, 128
          %s131 = scalar_lea.hbm %s1, %s130
          %s132 = sshll.u32 [#allocation5], 4
          %s133 = int_to_ptr.vmem [resolvable:$true] %s132
          %138 = dma.hbm_to_vmem [thread:$0]  %s131, 768, %s133, [#allocation6], 128, 128, 8
        $region16: #{tpu_custom_call.1} parent=11 // pred_fallthru
          _
      $region12: #{tpu_custom_call.1} parent=5 // pred_fallthru
        _
      %p139 = scmp.lt.s32.totalorder %s15, 2
      // Predicated region
      $region17: #{tpu_custom_call.1} parent=5 // pred_check
        %p140 = pneg %p139
      $region18: #{tpu_custom_call.1} parent=5 // pred_check_branch
        %142 = sbr.rel (%p140) target = $region20
      $region19: #{tpu_custom_call.1} parent=5 // pred_region
        // Predicated region
        $region21: #{tpu_custom_call.1} parent=19 // pred_check
          %p143 = pneg %p49
        $region22: #{tpu_custom_call.1} parent=19 // pred_check_branch
          %145 = sbr.rel (%p143) target = $region24
        $region23: #{tpu_custom_call.1} parent=19 // pred_region
          %s146 = sand.u32 %s39, 1
          %s147 = scalar_lea.sflag [#allocation3], %s146
          %s148 = sand.u32 %s39, 1
          %s149 = smul.addr %s148, 32
          %s150 = scalar_lea.vmem [#allocation2], %s149
          %s151 = smul.u32 2, %s23
          %s153 = ssub.s32 512, 512
          %154 = vsyncadd %s147, %s153
          %s155 = smul.addr %s151, 2
          %s156 = sadd.s32 %s22, %s155
          %s157 = smul.addr %s156, 128
          %s158 = scalar_lea.hbm %s0, %s157
          %s159 = sshll.u32 %s150, 4
          %s160 = int_to_ptr.vmem [resolvable:$true] %s159
          %165 = dma.hbm_to_vmem [thread:$0]  %s158, 512, %s160, %s147, 128, 128, 8
        $region24: #{tpu_custom_call.1} parent=19 // pred_fallthru
          _
      $region20: #{tpu_custom_call.1} parent=5 // pred_fallthru
        _
      %p166 = scmp.le.s32.totalorder 1, %s15
      %p167 = scmp.lt.s32.totalorder %s15, 3
      %p168 = pnand %p166, %p167
      %p169 = pneg %p168
      // Predicated region
      $region25: #{tpu_custom_call.1} parent=5 // pred_check
        _
      $region26: #{tpu_custom_call.1} parent=5 // pred_check_branch
        %171 = sbr.rel (%p168) target = $region28
      $region27: #{tpu_custom_call.1} parent=5 // pred_region
        %s172 = ssub.s32 %s15, 1
        %s173 = sand.u32 %s42, 1
        %s174 = scalar_lea.sflag [#allocation3], %s173
        %s175 = sand.u32 %s42, 1
        %s176 = smul.addr %s175, 32
        %s177 = scalar_lea.vmem [#allocation2], %s176
        // Predicated region
        $region29: #{tpu_custom_call.1} parent=27 // pred_check
          %p178 = pneg %p55
        $region30: #{tpu_custom_call.1} parent=27 // pred_check_branch
          %180 = sbr.rel (%p178) target = $region32
        $region31: #{tpu_custom_call.1} parent=27 // pred_region
          %181 = dma.done %s174, 512
        $region32: #{tpu_custom_call.1} parent=27 // pred_fallthru
          _
        // Predicated region
        $region33: #{tpu_custom_call.1} parent=27 // pred_check
          %p182 = pneg %p81
        $region34: #{tpu_custom_call.1} parent=27 // pred_check_branch
          %184 = sbr.rel (%p182) target = $region36
        $region35: #{tpu_custom_call.1} parent=27 // pred_region
          %185 = dma.done [#allocation6], 768
        $region36: #{tpu_custom_call.1} parent=27 // pred_fallthru
          _
        %s186 = sand.u32 %s42, 1
        %s187 = scalar_lea.sflag [#allocation3], %s186
        %s188 = sand.u32 %s42, 1
        %s189 = smul.addr %s188, 32
        %s190 = scalar_lea.vmem [#allocation2], %s189
        %p191 = pneg %p55
        %p192 = pneg %p52
        %p193 = pneg %p81
        %p194 = pneg %p78
        %p195 = pneg %p109
        %p196 = pneg %p106
        %s197 = sand.u32 %s96, 1
        %s198 = scalar_lea.sflag [#allocation4], %s197
        %s199 = sand.u32 %s96, 1
        %s200 = smul.addr %s199, 32
        %s201 = scalar_lea.vmem [#allocation7], %s200
        %s202 = smul.u32 2, %s25
        %s203 = smul.u32 2, %s25
        %v204 = vld [vmem:[%s177] sm:$0xff]
        %v205 = vld [vmem:[%s177 + $0x8] sm:$0xff]
        %v206 = vld [vmem:[%s177 + $0x10] sm:$0xff]
        %v207 = vld [vmem:[%s177 + $0x18] sm:$0xff]
        %s208 = scalar_lea.vmem [#allocation5], 16
        %v209 = vld [vmem:[%s208] sm:$0xff]
        %v210 = vld [vmem:[%s208 + $0x8] sm:$0xff]
        %v211 = vmul.f32 %v204, %v209
        %v212 = vmul.f32 %v205, %v210
        %v213 = vmul.f32 %v206, %v209
        %v214 = vmul.f32 %v207, %v210
        %vm219 = vcmask 1040384
        %v220 = vrot.slane %v204, 7
        %v221 = vrot.slane %v205, 7
        %v222 = vsel %vm219, %v220, %v221
        %v223 = vrot.slane %v206, 7
        %v224 = vrot.slane %v207, 7
        %v225 = vsel %vm219, %v223, %v224
        %v230 = vsel %vm219, 0.0, %v220
        %v231 = vsel %vm219, 0.0, %v223
        %v232 = vld [vmem:[#allocation5] sm:$0xff]
        %v233 = vld [vmem:[#allocation5 + $0x8] sm:$0xff]
        %v234 = vmul.f32 %v230, %v232
        %v235 = vmul.f32 %v222, %v233
        %v236 = vmul.f32 %v231, %v232
        %v237 = vmul.f32 %v225, %v233
        %v238 = vadd.f32 %v211, %v234
        %v239 = vadd.f32 %v212, %v235
        %v240 = vadd.f32 %v213, %v236
        %v241 = vadd.f32 %v214, %v237
        %vm242 = vcmask 1046528
        %v243 = vrot.slane %v204, 1
        %v244 = vrot.slane %v205, 1
        %v245 = vsel %vm242, %v243, %v244
        %v246 = vrot.slane %v206, 1
        %v247 = vrot.slane %v207, 1
        %v248 = vsel %vm242, %v246, %v247
        %v253 = vsel %vm242, %v244, 0.0
        %v254 = vsel %vm242, %v247, 0.0
        %s255 = scalar_lea.vmem [#allocation5], 32
        %v256 = vld [vmem:[%s255] sm:$0xff]
        %v257 = vld [vmem:[%s255 + $0x8] sm:$0xff]
        %v258 = vmul.f32 %v245, %v256
        %v259 = vmul.f32 %v253, %v257
        %v260 = vmul.f32 %v248, %v256
        %v261 = vmul.f32 %v254, %v257
        %v262 = vadd.f32 %v238, %v258
        %v263 = vadd.f32 %v239, %v259
        %v264 = vadd.f32 %v240, %v260
        %v265 = vadd.f32 %v241, %v261
        %v266 = vadd.f32 %v204, %v262
        %v267 = vadd.f32 %v205, %v263
        %v268 = vadd.f32 %v206, %v264
        %v269 = vadd.f32 %v207, %v265
        %270 = vst [vmem:[%s201] sm:$0xff] %v266
        %271 = vst [vmem:[%s201 + $0x8] sm:$0xff] %v267
        %272 = vst [vmem:[%s201 + $0x10] sm:$0xff] %v268
        %273 = vst [vmem:[%s201 + $0x18] sm:$0xff] %v269
        %s274 = sand.u32 %s96, 1
        %s275 = scalar_lea.sflag [#allocation4], %s274
        %s276 = sand.u32 %s96, 1
        %s277 = smul.addr %s276, 32
        %s278 = scalar_lea.vmem [#allocation7], %s277
        // Predicated region
        $region37: #{tpu_custom_call.1} parent=27 // pred_check
          %p279 = pneg %p106
        $region38: #{tpu_custom_call.1} parent=27 // pred_check_branch
          %281 = sbr.rel (%p279) target = $region40
        $region39: #{tpu_custom_call.1} parent=27 // pred_region
          %s282 = smul.u32 2, %s25
          %s284 = ssub.s32 512, 512
          %285 = vsyncadd %s275, %s284
          %s286 = smul.addr %s282, 2
          %s287 = sadd.s32 %s24, %s286
          %s288 = smul.addr %s287, 128
          %s289 = scalar_lea.hbm %s2, %s288
          %s290 = sshll.u32 %s278, 4
          %s291 = int_to_ptr.vmem [resolvable:$true] %s290
          %296 = dma.vmem_to_hbm [thread:$0]  %s291, 512, %s289, %s275, 128, 128, 8
        $region40: #{tpu_custom_call.1} parent=27 // pred_fallthru
          _
      $region28: #{tpu_custom_call.1} parent=5 // pred_fallthru
        _
      %p297 = scmp.le.s32.totalorder 2, %s15
      // Predicated region
      $region41: #{tpu_custom_call.1} parent=5 // pred_check
        %p298 = pneg %p297
      $region42: #{tpu_custom_call.1} parent=5 // pred_check_branch
        %300 = sbr.rel (%p298) target = $region44
      $region43: #{tpu_custom_call.1} parent=5 // pred_region
        %s301 = ssub.s32 %s15, 2
        // Predicated region
        $region45: #{tpu_custom_call.1} parent=43 // pred_check
          %p302 = pneg %p112
        $region46: #{tpu_custom_call.1} parent=43 // pred_check_branch
          %304 = sbr.rel (%p302) target = $region48
        $region47: #{tpu_custom_call.1} parent=43 // pred_region
          %s305 = sand.u32 %s97, 1
          %s306 = scalar_lea.sflag [#allocation4], %s305
          %s307 = sand.u32 %s97, 1
          %s308 = smul.addr %s307, 32
          %s309 = scalar_lea.vmem [#allocation7], %s308
          %310 = dma.done %s306, 512
        $region48: #{tpu_custom_call.1} parent=43 // pred_fallthru
          _
      $region44: #{tpu_custom_call.1} parent=5 // pred_fallthru
        _
    $region6: #{tpu_custom_call.1} parent=1 // loop_footer
      %s19 = sadd.s32 1, %s15
    $region7: #{tpu_custom_call.1} parent=1 // loop_footer_branch
      %14 = sbr.rel target = $region3
    $region8: #{tpu_custom_call.1} parent=1 // loop_exit
      _
    %311 = vsyncpa [#allocation3], 1
    %s312 = scalar_lea.sflag [#allocation3], 1
    %313 = vsyncpa %s312, 1
    %314 = vsyncpa [#allocation6], 1
    %315 = vsyncpa [#allocation4], 1
    %s316 = scalar_lea.sflag [#allocation4], 1
    %317 = vsyncpa %s316, 1

</llo_original>
